<compile_context>
chip_gen: v5e
topology: v5e:2x2
jax: 0.10.0
libtpu: 0.0.40
codegen_flags: <defaults>
</compile_context>

<pallas_src>
import math

import jax
import jax.numpy as jnp
from jax.experimental import pallas as pl
from jax.experimental.pallas import tpu as pltpu


def _round_up(x, m):
    return (x + m - 1) // m * m


# ----------------------------------------------------------------------------
# Pallas kernel: fused packed matmul + bias + in-kernel anchors + box decode
# ----------------------------------------------------------------------------
def _make_pred_kernel(stride, H, W, num_classes, tile_m, nout):
    s = float(stride)
    n_spatial = float(H * W)
    inv_n = 1.0 / float(H * W)
    inv_w = 1.0 / float(W)
    C = num_classes

    def kernel(cls_ref, reg_ref, wc_ref, wr_ref, wwh_ref, bm_ref, bwh_ref, out_ref):
        cls_x = cls_ref[...]                       # (tile_m, Ccls)
        reg_x = reg_ref[...]                       # (tile_m, Creg)

        # Fused 1x1 convs -> one packed (tile_m, nout) slab on the MXU.
        #   lanes [0, C)     : cls logits
        #   lanes [C, C+4)   : raw reg (tx, ty, tw, th)
        #   lanes [C+4, C+8) : stride * (tx, ty, tx, ty)  (box centre pre-sum)
        y = (jnp.dot(cls_x, wc_ref[...], preferred_element_type=jnp.float32)
             + jnp.dot(reg_x, wr_ref[...], preferred_element_type=jnp.float32)
             + bm_ref[...])
        # Second slab: (tw, th, tw, th) replicated on the box lanes, zero elsewhere.
        z = (jnp.dot(reg_x, wwh_ref[...], preferred_element_type=jnp.float32)
             + bwh_ref[...])

        # Per-row anchors generated on the VPU (no anchor DMA).
        # global row r = b*H*W + y*W + x ; recover (x, y) with exact float
        # truncating divisions by the compile-time constants H*W and W.
        row0 = pl.program_id(0) * tile_m
        ridx = jax.lax.broadcasted_iota(jnp.int32, (tile_m, nout), 0) + row0
        r = ridx.astype(jnp.float32)
        n = r - n_spatial * ((r + 0.5) * inv_n).astype(jnp.int32).astype(jnp.float32)
        y_idx = ((n + 0.5) * inv_w).astype(jnp.int32).astype(jnp.float32)
        x_idx = n - float(W) * y_idx

        lane = jax.lax.broadcasted_iota(jnp.int32, (tile_m, nout), 1)
        is_x_lane = ((lane - (C + 4)) & 1) == 0          # x1/x2 lanes vs y1/y2 lanes
        anchor = jnp.where(is_x_lane, (x_idx + 0.5) * s, (y_idx + 0.5) * s)
        half = jnp.where(lane < C + 6, -0.5 * s, 0.5 * s)  # x1y1 -> -, x2y2 -> +
        box_lane = (lane >= C + 4) & (lane < C + 8)

        # Box lanes already hold stride*reg_xy from the matmul; add anchors and
        # +/- 0.5*stride*exp(tw/th). Everything stays full-width -> one unmasked
        # store of the whole packed tile.
        out_ref[...] = y + jnp.where(box_lane, anchor + half * jnp.exp(z), 0.0)

    return kernel


# ----------------------------------------------------------------------------
# Single level wrapper (SingleLevelPredLayer.forward)
# ----------------------------------------------------------------------------
def _single_level_pred(cls_feat_nchw, reg_feat_nchw, params, stride, tile_rows=1024):
    B, Ccls, H, W = cls_feat_nchw.shape
    _, Creg, _, _ = reg_feat_nchw.shape
    cls_w = params["cls_w"]                     # (Ccls, num_classes)
    cls_b = params["cls_b"].reshape(-1)         # (num_classes,)
    reg_w = params["reg_w"]                     # (Creg, 4)
    reg_b = params["reg_b"].reshape(-1)         # (4,)
    C = cls_w.shape[1]
    N = H * W
    M = B * N
    NOUT = _round_up(C + 8, 128)                # lane-dense packed output width
    s = float(stride)

    # NCHW -> NHWC rows (channels on lanes).
    cls_rows = jnp.transpose(cls_feat_nchw, (0, 2, 3, 1)).reshape(M, Ccls)
    reg_rows = jnp.transpose(reg_feat_nchw, (0, 2, 3, 1)).reshape(M, Creg)

    # Large row tiles; pad rows to a tile multiple (no divisibility assumption).
    tile_m = min(tile_rows, _round_up(M, 8))
    M_pad = _round_up(M, tile_m)
    if M_pad != M:
        pad = M_pad - M
        cls_rows = jnp.pad(cls_rows, ((0, pad), (0, 0)))
        reg_rows = jnp.pad(reg_rows, ((0, pad), (0, 0)))

    # Packed block weights / biases (built once per level on host/XLA side).
    wc_main = jnp.zeros((Ccls, NOUT), jnp.float32).at[:, :C].set(cls_w)
    wr_main = jnp.zeros((Creg, NOUT), jnp.float32)
    wr_main = wr_main.at[:, C:C + 4].set(reg_w)
    wr_main = wr_main.at[:, C + 4:C + 8].set(
        jnp.concatenate([reg_w[:, :2], reg_w[:, :2]], axis=1) * s)
    wr_wh = jnp.zeros((Creg, NOUT), jnp.float32)
    wr_wh = wr_wh.at[:, C + 4:C + 8].set(
        jnp.concatenate([reg_w[:, 2:4], reg_w[:, 2:4]], axis=1))

    b_main = jnp.zeros((1, NOUT), jnp.float32)
    b_main = b_main.at[0, :C].set(cls_b)
    b_main = b_main.at[0, C:C + 4].set(reg_b)
    b_main = b_main.at[0, C + 4:C + 8].set(jnp.concatenate([reg_b[:2], reg_b[:2]]) * s)
    b_wh = jnp.zeros((1, NOUT), jnp.float32)
    b_wh = b_wh.at[0, C + 4:C + 8].set(jnp.concatenate([reg_b[2:4], reg_b[2:4]]))

    grid = (M_pad // tile_m,)
    kernel = _make_pred_kernel(stride, H, W, C, tile_m, NOUT)

    packed = pl.pallas_call(
        kernel,
        grid=grid,
        in_specs=[
            pl.BlockSpec((tile_m, Ccls), lambda i: (i, 0)),
            pl.BlockSpec((tile_m, Creg), lambda i: (i, 0)),
            pl.BlockSpec((Ccls, NOUT), lambda i: (0, 0)),
            pl.BlockSpec((Creg, NOUT), lambda i: (0, 0)),
            pl.BlockSpec((Creg, NOUT), lambda i: (0, 0)),
            pl.BlockSpec((1, NOUT), lambda i: (0, 0)),
            pl.BlockSpec((1, NOUT), lambda i: (0, 0)),
        ],
        out_specs=pl.BlockSpec((tile_m, NOUT), lambda i: (i, 0)),
        out_shape=jax.ShapeDtypeStruct((M_pad, NOUT), jnp.float32),
        compiler_params=pltpu.CompilerParams(
            dimension_semantics=("parallel",)),
    )(cls_rows, reg_rows, wc_main, wr_main, wr_wh, b_main, b_wh)

    packed = packed[:M]
    pred_cls = packed[:, :C].reshape(B, N, C)
    pred_reg = packed[:, C:C + 4].reshape(B, N, 4)
    pred_box = packed[:, C + 4:C + 8].reshape(B, N, 4)

    # Small per-level metadata (same as SingleLevelPredLayer outputs).
    ys, xs = jnp.meshgrid(jnp.arange(H), jnp.arange(W), indexing="ij")
    anchors = (jnp.stack([xs, ys], -1).astype(jnp.float32).reshape(N, 2) + 0.5) * s
    stride_tensor = jnp.full((N, 1), s, jnp.float32)

    return {
        "pred_cls": pred_cls,
        "pred_reg": pred_reg,
        "pred_box": pred_box,
        "anchors": anchors,
        "stride": stride,
        "stride_tensors": stride_tensor,
    }


def multi_level_pred(cls_feats, reg_feats, level_params, strides):
    """MultiLevelPredLayer.forward."""
    all_cls, all_box, all_reg, all_anchors, all_stride_t = [], [], [], [], []
    for level, stride in enumerate(strides):
        out = _single_level_pred(cls_feats[level], reg_feats[level],
                                 level_params[level], stride)
        all_cls.append(out["pred_cls"])
        all_box.append(out["pred_box"])
        all_reg.append(out["pred_reg"])
        all_anchors.append(out["anchors"])
        all_stride_t.append(out["stride_tensors"])
    return {
        "pred_cls": all_cls,
        "pred_box": all_box,
        "pred_reg": all_reg,
        "anchors": all_anchors,
        "strides": strides,
        "stride_tensors": all_stride_t,
    }


# ----------------------------------------------------------------------------
# Deterministic parameter init (mirrors SingleLevelPredLayer.__init__/init_bias)
# ----------------------------------------------------------------------------
def init_level_params(key, cls_dim, reg_dim, num_classes, num_coords, stride):
    k1, k2 = jax.random.split(key)
    cls_bias_val = math.log(5.0 / num_classes / (640.0 / stride) ** 2)
    return {
        # weights stored as (C_in, C_out) for row-major matmul
        "cls_w": jax.random.normal(k1, (cls_dim, num_classes), jnp.float32) * 0.01,
        "cls_b": jnp.full((1, num_classes), cls_bias_val, jnp.float32),
        "reg_w": jax.random.normal(k2, (reg_dim, num_coords), jnp.float32) * 0.01,
        "reg_b": jnp.full((1, num_coords), 1.0, jnp.float32),
    }


# ----------------------------------------------------------------------------
# Pure-JAX reference for verification
# ----------------------------------------------------------------------------
def _ref_single_level(cls_feat, reg_feat, params, stride):
    B, Ccls, H, W = cls_feat.shape
    N = H * W
    x_cls = jnp.transpose(cls_feat, (0, 2, 3, 1)).reshape(B, N, Ccls)
    x_reg = jnp.transpose(reg_feat, (0, 2, 3, 1)).reshape(B, N, -1)
    cls_pred = jnp.einsum("bnc,ck->bnk", x_cls, params["cls_w"],
                          precision=jax.lax.Precision.HIGHEST) + params["cls_b"][0]
    reg_pred = jnp.einsum("bnc,ck->bnk", x_reg, params["reg_w"],
                          precision=jax.lax.Precision.HIGHEST) + params["reg_b"][0]
    ys, xs = jnp.meshgrid(jnp.arange(H), jnp.arange(W), indexing="ij")
    anchors = (jnp.stack([xs, ys], -1).astype(jnp.float32).reshape(N, 2) + 0.5) * stride
    ctr = reg_pred[..., :2] * stride + anchors[None, :, :2]
    wh = jnp.exp(reg_pred[..., 2:]) * stride
    box = jnp.concatenate([ctr - 0.5 * wh, ctr + 0.5 * wh], axis=-1)
    return cls_pred, reg_pred, box


if __name__ == "__main__":
    # Small, consistent multi-level shapes: strides 8/16/32 on a 64x64 image.
    B = 2
    cls_dim = reg_dim = 32
    num_classes = 80
    num_coords = 4
    strides = (8, 16, 32)
    spatials = (8, 4, 2)
    num_levels = 3

    root = jax.random.PRNGKey(0)
    feat_keys = jax.random.split(root, 2 * num_levels + num_levels)

    cls_feats, reg_feats, level_params = [], [], []
    for lvl in range(num_levels):
        hw = spatials[lvl]
        cls_feats.append(jax.random.normal(feat_keys[2 * lvl],
                                           (B, cls_dim, hw, hw), jnp.float32))
        reg_feats.append(jax.random.normal(feat_keys[2 * lvl + 1],
                                           (B, reg_dim, hw, hw), jnp.float32))
        level_params.append(init_level_params(feat_keys[2 * num_levels + lvl],
                                              cls_dim, reg_dim, num_classes,
                                              num_coords, strides[lvl]))

    outputs = multi_level_pred(cls_feats, reg_feats, level_params, strides)
    jax.block_until_ready(outputs)

    # Verify against pure-JAX reference.
    for lvl in range(num_levels):
        ref_cls, ref_reg, ref_box = _ref_single_level(
            cls_feats[lvl], reg_feats[lvl], level_params[lvl], strides[lvl])
        assert jnp.allclose(outputs["pred_cls"][lvl], ref_cls, rtol=1e-3, atol=1e-3)
        assert jnp.allclose(outputs["pred_reg"][lvl], ref_reg, rtol=1e-3, atol=1e-3)
        assert jnp.allclose(outputs["pred_box"][lvl], ref_box, rtol=1e-3, atol=1e-2)
        assert outputs["pred_cls"][lvl].shape == (B, spatials[lvl] ** 2, num_classes)
        assert outputs["pred_box"][lvl].shape == (B, spatials[lvl] ** 2, 4)
        assert outputs["anchors"][lvl].shape == (spatials[lvl] ** 2, 2)
        assert outputs["stride_tensors"][lvl].shape == (spatials[lvl] ** 2, 1)

    print("KERNEL_OK")
</pallas_src>

<mosaic_0001>
module attributes {stable_mosaic.version = 11 : i64} {
  func.func @kernel(%arg0: i32, %arg1: memref<128x32xf32, #tpu.memory_space<vmem>>, %arg2: memref<128x32xf32, #tpu.memory_space<vmem>>, %arg3: memref<32x128xf32, #tpu.memory_space<vmem>>, %arg4: memref<32x128xf32, #tpu.memory_space<vmem>>, %arg5: memref<32x128xf32, #tpu.memory_space<vmem>>, %arg6: memref<1x128xf32, #tpu.memory_space<vmem>>, %arg7: memref<1x128xf32, #tpu.memory_space<vmem>>, %arg8: memref<128x128xf32, #tpu.memory_space<vmem>>) attributes {dimension_semantics = [#tpu.dimension_semantics<parallel>], iteration_bounds = array<i64: 1>, scalar_prefetch = 0 : i64, scratch_operands = 0 : i64, tpu.core_type = #tpu.core_type<tc>, window_params = [{transform_indices = @transform_0, window_bounds = array<i64: 128, 32>}, {transform_indices = @transform_1, window_bounds = array<i64: 128, 32>}, {pipeline_mode = #tpu.pipeline_mode<synchronous>, transform_indices = @transform_2, window_bounds = array<i64: 32, 128>}, {pipeline_mode = #tpu.pipeline_mode<synchronous>, transform_indices = @transform_3, window_bounds = array<i64: 32, 128>}, {pipeline_mode = #tpu.pipeline_mode<synchronous>, transform_indices = @transform_4, window_bounds = array<i64: 32, 128>}, {pipeline_mode = #tpu.pipeline_mode<synchronous>, transform_indices = @transform_5, window_bounds = array<i64: 1, 128>}, {pipeline_mode = #tpu.pipeline_mode<synchronous>, transform_indices = @transform_6, window_bounds = array<i64: 1, 128>}, {transform_indices = @transform_7, window_bounds = array<i64: 128, 128>}]} {
    %c0 = arith.constant 0 : index
    %c0_0 = arith.constant 0 : index
    %0 = vector.load %arg1[%c0, %c0_0] : memref<128x32xf32, #tpu.memory_space<vmem>>, vector<128x32xf32>
    %c0_1 = arith.constant 0 : index
    %c0_2 = arith.constant 0 : index
    %1 = vector.load %arg2[%c0_1, %c0_2] : memref<128x32xf32, #tpu.memory_space<vmem>>, vector<128x32xf32>
    %c0_3 = arith.constant 0 : index
    %c0_4 = arith.constant 0 : index
    %2 = vector.load %arg3[%c0_3, %c0_4] : memref<32x128xf32, #tpu.memory_space<vmem>>, vector<32x128xf32>
    %cst = arith.constant dense<0.000000e+00> : vector<128x128xf32>
    %3 = tpu.matmul %0, %2, %cst {dimension_numbers = #tpu.dot_dimension_numbers<[1], [0], [0], [1], [0, 0, 1, 1], [], []>} : vector<128x32xf32>, vector<32x128xf32>, vector<128x128xf32> -> vector<128x128xf32>
    %c0_5 = arith.constant 0 : index
    %c0_6 = arith.constant 0 : index
    %4 = vector.load %arg4[%c0_5, %c0_6] : memref<32x128xf32, #tpu.memory_space<vmem>>, vector<32x128xf32>
    %cst_7 = arith.constant dense<0.000000e+00> : vector<128x128xf32>
    %5 = tpu.matmul %1, %4, %cst_7 {dimension_numbers = #tpu.dot_dimension_numbers<[1], [0], [0], [1], [0, 0, 1, 1], [], []>} : vector<128x32xf32>, vector<32x128xf32>, vector<128x128xf32> -> vector<128x128xf32>
    %6 = arith.addf %3, %5 : vector<128x128xf32>
    %c0_8 = arith.constant 0 : index
    %c0_9 = arith.constant 0 : index
    %7 = vector.load %arg6[%c0_8, %c0_9] : memref<1x128xf32, #tpu.memory_space<vmem>>, vector<1x128xf32>
    %8 = vector.broadcast %7 : vector<1x128xf32> to vector<128x128xf32>
    %9 = arith.addf %6, %8 : vector<128x128xf32>
    %c0_10 = arith.constant 0 : index
    %c0_11 = arith.constant 0 : index
    %10 = vector.load %arg5[%c0_10, %c0_11] : memref<32x128xf32, #tpu.memory_space<vmem>>, vector<32x128xf32>
    %cst_12 = arith.constant dense<0.000000e+00> : vector<128x128xf32>
    %11 = tpu.matmul %1, %10, %cst_12 {dimension_numbers = #tpu.dot_dimension_numbers<[1], [0], [0], [1], [0, 0, 1, 1], [], []>} : vector<128x32xf32>, vector<32x128xf32>, vector<128x128xf32> -> vector<128x128xf32>
    %c0_13 = arith.constant 0 : index
    %c0_14 = arith.constant 0 : index
    %12 = vector.load %arg7[%c0_13, %c0_14] : memref<1x128xf32, #tpu.memory_space<vmem>>, vector<1x128xf32>
    %13 = vector.broadcast %12 : vector<1x128xf32> to vector<128x128xf32>
    %14 = arith.addf %11, %13 : vector<128x128xf32>
    %c128_i32 = arith.constant 128 : i32
    %15 = arith.muli %arg0, %c128_i32 : i32
    %16 = tpu.iota {dimensions = array<i32: 0>} : vector<128x128xi32>
    %17 = vector.broadcast %15 : i32 to vector<128x128xi32>
    %18 = arith.addi %16, %17 : vector<128x128xi32>
    %19 = arith.sitofp %18 : vector<128x128xi32> to vector<128x128xf32>
    %cst_15 = arith.constant 5.000000e-01 : f32
    %20 = vector.broadcast %cst_15 : f32 to vector<128x128xf32>
    %21 = arith.addf %19, %20 : vector<128x128xf32>
    %cst_16 = arith.constant 1.562500e-02 : f32
    %22 = vector.broadcast %cst_16 : f32 to vector<128x128xf32>
    %23 = arith.mulf %21, %22 : vector<128x128xf32>
    %24 = arith.fptosi %23 : vector<128x128xf32> to vector<128x128xi32>
    %25 = arith.sitofp %24 : vector<128x128xi32> to vector<128x128xf32>
    %cst_17 = arith.constant 6.400000e+01 : f32
    %26 = vector.broadcast %cst_17 : f32 to vector<128x128xf32>
    %27 = arith.mulf %26, %25 : vector<128x128xf32>
    %28 = arith.subf %19, %27 : vector<128x128xf32>
    %cst_18 = arith.constant 5.000000e-01 : f32
    %29 = vector.broadcast %cst_18 : f32 to vector<128x128xf32>
    %30 = arith.addf %28, %29 : vector<128x128xf32>
    %cst_19 = arith.constant 1.250000e-01 : f32
    %31 = vector.broadcast %cst_19 : f32 to vector<128x128xf32>
    %32 = arith.mulf %30, %31 : vector<128x128xf32>
    %33 = arith.fptosi %32 : vector<128x128xf32> to vector<128x128xi32>
    %34 = arith.sitofp %33 : vector<128x128xi32> to vector<128x128xf32>
    %cst_20 = arith.constant 8.000000e+00 : f32
    %35 = vector.broadcast %cst_20 : f32 to vector<128x128xf32>
    %36 = arith.mulf %35, %34 : vector<128x128xf32>
    %37 = arith.subf %28, %36 : vector<128x128xf32>
    %38 = tpu.iota {dimensions = array<i32: 1>} : vector<128x128xi32>
    %c84_i32 = arith.constant 84 : i32
    %39 = vector.broadcast %c84_i32 : i32 to vector<128x128xi32>
    %40 = arith.subi %38, %39 : vector<128x128xi32>
    %c1_i32 = arith.constant 1 : i32
    %41 = vector.broadcast %c1_i32 : i32 to vector<128x128xi32>
    %42 = arith.andi %40, %41 : vector<128x128xi32>
    %c0_i32 = arith.constant 0 : i32
    %43 = vector.broadcast %c0_i32 : i32 to vector<128x128xi32>
    %44 = arith.cmpi eq, %42, %43 : vector<128x128xi32>
    %cst_21 = arith.constant 5.000000e-01 : f32
    %45 = vector.broadcast %cst_21 : f32 to vector<128x128xf32>
    %46 = arith.addf %37, %45 : vector<128x128xf32>
    %cst_22 = arith.constant 8.000000e+00 : f32
    %47 = vector.broadcast %cst_22 : f32 to vector<128x128xf32>
    %48 = arith.mulf %46, %47 : vector<128x128xf32>
    %cst_23 = arith.constant 5.000000e-01 : f32
    %49 = vector.broadcast %cst_23 : f32 to vector<128x128xf32>
    %50 = arith.addf %34, %49 : vector<128x128xf32>
    %cst_24 = arith.constant 8.000000e+00 : f32
    %51 = vector.broadcast %cst_24 : f32 to vector<128x128xf32>
    %52 = arith.mulf %50, %51 : vector<128x128xf32>
    %53 = arith.select %44, %48, %52 : vector<128x128xi1>, vector<128x128xf32>
    %c86_i32 = arith.constant 86 : i32
    %54 = vector.broadcast %c86_i32 : i32 to vector<128x128xi32>
    %55 = arith.cmpi slt, %38, %54 : vector<128x128xi32>
    %cst_25 = arith.constant -4.000000e+00 : f32
    %cst_26 = arith.constant 4.000000e+00 : f32
    %56 = vector.broadcast %cst_25 : f32 to vector<128x128xf32>
    %57 = vector.broadcast %cst_26 : f32 to vector<128x128xf32>
    %58 = arith.select %55, %56, %57 : vector<128x128xi1>, vector<128x128xf32>
    %c84_i32_27 = arith.constant 84 : i32
    %59 = vector.broadcast %c84_i32_27 : i32 to vector<128x128xi32>
    %60 = arith.cmpi sge, %38, %59 : vector<128x128xi32>
    %c88_i32 = arith.constant 88 : i32
    %61 = vector.broadcast %c88_i32 : i32 to vector<128x128xi32>
    %62 = arith.cmpi slt, %38, %61 : vector<128x128xi32>
    %63 = arith.andi %60, %62 : vector<128x128xi1>
    %64 = math.exp %14 : vector<128x128xf32>
    %65 = arith.mulf %58, %64 : vector<128x128xf32>
    %66 = arith.addf %53, %65 : vector<128x128xf32>
    %cst_28 = arith.constant 0.000000e+00 : f32
    %67 = vector.broadcast %cst_28 : f32 to vector<128x128xf32>
    %68 = arith.select %63, %66, %67 : vector<128x128xi1>, vector<128x128xf32>
    %69 = arith.addf %9, %68 : vector<128x128xf32>
    %c0_29 = arith.constant 0 : index
    %c0_30 = arith.constant 0 : index
    %70 = vector.load %arg8[%c0_29, %c0_30] : memref<128x128xf32, #tpu.memory_space<vmem>>, vector<128x128xf32>
    tpu.vector_store %arg8[%c0_29, %c0_30], %69 {strides = array<i32>} : memref<128x128xf32, #tpu.memory_space<vmem>>, vector<128x128xf32>,
    return
  }
  func.func @transform_0(%arg0: i32) -> (i32, i32) {
    %c0_i32 = arith.constant 0 : i32
    %c0_i32_0 = arith.constant 0 : i32
    return %arg0, %c0_i32 : i32, i32
  }
  func.func @transform_1(%arg0: i32) -> (i32, i32) {
    %c0_i32 = arith.constant 0 : i32
    %c0_i32_0 = arith.constant 0 : i32
    return %arg0, %c0_i32 : i32, i32
  }
  func.func @transform_2(%arg0: i32) -> (i32, i32) {
    %c0_i32 = arith.constant 0 : i32
    %c0_i32_0 = arith.constant 0 : i32
    %c0_i32_1 = arith.constant 0 : i32
    return %c0_i32, %c0_i32_0 : i32, i32
  }
  func.func @transform_3(%arg0: i32) -> (i32, i32) {
    %c0_i32 = arith.constant 0 : i32
    %c0_i32_0 = arith.constant 0 : i32
    %c0_i32_1 = arith.constant 0 : i32
    return %c0_i32, %c0_i32_0 : i32, i32
  }
  func.func @transform_4(%arg0: i32) -> (i32, i32) {
    %c0_i32 = arith.constant 0 : i32
    %c0_i32_0 = arith.constant 0 : i32
    %c0_i32_1 = arith.constant 0 : i32
    return %c0_i32, %c0_i32_0 : i32, i32
  }
  func.func @transform_5(%arg0: i32) -> (i32, i32) {
    %c0_i32 = arith.constant 0 : i32
    %c0_i32_0 = arith.constant 0 : i32
    %c0_i32_1 = arith.constant 0 : i32
    return %c0_i32, %c0_i32_0 : i32, i32
  }
  func.func @transform_6(%arg0: i32) -> (i32, i32) {
    %c0_i32 = arith.constant 0 : i32
    %c0_i32_0 = arith.constant 0 : i32
    %c0_i32_1 = arith.constant 0 : i32
    return %c0_i32, %c0_i32_0 : i32, i32
  }
  func.func @transform_7(%arg0: i32) -> (i32, i32) {
    %c0_i32 = arith.constant 0 : i32
    %c0_i32_0 = arith.constant 0 : i32
    return %arg0, %c0_i32 : i32, i32
  }
}

</mosaic_0001>

<llo_original>
// kernel: tpu_custom_call.1
$region0: #{tpu_custom_call.1}
  #allocation0 [shape = 'u32[]', space=smem, size = 0x4, offset = 0x4, fixed_abs, tag = 'smem constant byte address 0x4 - core index']
  #allocation1 [shape = 'u32[72,128]{1,0:T(1,128)}', space=vmem, size = 0x9000, scoped, tag = 'internal scratch']
  %s0 = inlined_call_operand.vmem [shape: f32[128,32], index: 0, kind: input, shape index: {}]
  %s1 = inlined_call_operand.vmem [shape: f32[128,32], index: 1, kind: input, shape index: {}]
  %s2 = inlined_call_operand.vmem [shape: f32[32,128], index: 2, kind: input, shape index: {}]
  %s3 = inlined_call_operand.vmem [shape: f32[32,128], index: 3, kind: input, shape index: {}]
  %s4 = inlined_call_operand.vmem [shape: f32[32,128], index: 4, kind: input, shape index: {}]
  %s5 = inlined_call_operand.vmem [shape: f32[1,128], index: 5, kind: input, shape index: {}]
  %s6 = inlined_call_operand.vmem [shape: f32[1,128], index: 6, kind: input, shape index: {}]
  %s7 = inlined_call_operand.hbm [shape: f32[128,128], index: 7, kind: output, shape index: {}]
  %s8 = sld [smem:[#allocation0]]
  $region38: #{tpu_custom_call.1} parent=0
    _
  %s10 = ssub.s32 1, %s8
  %s11 = scalar_select 0, %s10, %s8
  $region1: #{tpu_custom_call.1} parent=0
    #allocation2 [shape = 'u8[65536]{0}', space=vmem, size = 0x10000, scoped, tag = 'output window, operand 0, single buffered']
    #allocation3 [shape = 's32[1]{0}', space=sflag, size = 0x4, scoped, tag = 'scoped memory for tpu_custom_call.1']
    %12 = vsyncpa [#allocation3], 0
    // Predicated region
    $region2: #{tpu_custom_call.1} parent=1 // pred_check
      _
    $region3: #{tpu_custom_call.1} parent=1 // pred_check_branch
      %14 = sbr.rel (0) target = $region5
    $region4: #{tpu_custom_call.1} parent=1 // pred_region
      _
    $region5: #{tpu_custom_call.1} parent=1 // pred_fallthru
      _
    // Predicated region
    $region6: #{tpu_custom_call.1} parent=1 // pred_check
      _
    $region7: #{tpu_custom_call.1} parent=1 // pred_check_branch
      %16 = sbr.rel (0) target = $region9
    $region8: #{tpu_custom_call.1} parent=1 // pred_region
      _
    $region9: #{tpu_custom_call.1} parent=1 // pred_fallthru
      _
    // Predicated region
    $region10: #{tpu_custom_call.1} parent=1 // pred_check
      _
    $region11: #{tpu_custom_call.1} parent=1 // pred_check_branch
      %18 = sbr.rel (0) target = $region13
    $region12: #{tpu_custom_call.1} parent=1 // pred_region
      _
    $region13: #{tpu_custom_call.1} parent=1 // pred_fallthru
      _
    // Predicated region
    $region14: #{tpu_custom_call.1} parent=1 // pred_check
      _
    $region15: #{tpu_custom_call.1} parent=1 // pred_check_branch
      %20 = sbr.rel (0) target = $region17
    $region16: #{tpu_custom_call.1} parent=1 // pred_region
      _
    $region17: #{tpu_custom_call.1} parent=1 // pred_fallthru
      _
    // Predicated region
    $region18: #{tpu_custom_call.1} parent=1 // pred_check
      _
    $region19: #{tpu_custom_call.1} parent=1 // pred_check_branch
      %22 = sbr.rel (0) target = $region21
    $region20: #{tpu_custom_call.1} parent=1 // pred_region
      _
    $region21: #{tpu_custom_call.1} parent=1 // pred_fallthru
      _
    // Predicated region
    $region22: #{tpu_custom_call.1} parent=1 // pred_check
      _
    $region23: #{tpu_custom_call.1} parent=1 // pred_check_branch
      %24 = sbr.rel (0) target = $region25
    $region24: #{tpu_custom_call.1} parent=1 // pred_region
      _
    $region25: #{tpu_custom_call.1} parent=1 // pred_fallthru
      _
    // Predicated region
    $region26: #{tpu_custom_call.1} parent=1 // pred_check
      _
    $region27: #{tpu_custom_call.1} parent=1 // pred_check_branch
      %26 = sbr.rel (0) target = $region29
    $region28: #{tpu_custom_call.1} parent=1 // pred_region
      _
    $region29: #{tpu_custom_call.1} parent=1 // pred_fallthru
      _
    %v27 = vld [vmem:[%s0] sm:$0xff]
    %v28 = vld [vmem:[%s0 + $0x8] sm:$0xff]
    %v29 = vld [vmem:[%s0 + $0x10] sm:$0xff]
    %v30 = vld [vmem:[%s0 + $0x18] sm:$0xff]
    %v31 = vld [vmem:[%s0 + $0x20] sm:$0xff]
    %v32 = vld [vmem:[%s0 + $0x28] sm:$0xff]
    %v33 = vld [vmem:[%s0 + $0x30] sm:$0xff]
    %v34 = vld [vmem:[%s0 + $0x38] sm:$0xff]
    %v35 = vld [vmem:[%s0 + $0x40] sm:$0xff]
    %v36 = vld [vmem:[%s0 + $0x48] sm:$0xff]
    %v37 = vld [vmem:[%s0 + $0x50] sm:$0xff]
    %v38 = vld [vmem:[%s0 + $0x58] sm:$0xff]
    %v39 = vld [vmem:[%s0 + $0x60] sm:$0xff]
    %v40 = vld [vmem:[%s0 + $0x68] sm:$0xff]
    %v41 = vld [vmem:[%s0 + $0x70] sm:$0xff]
    %v42 = vld [vmem:[%s0 + $0x78] sm:$0xff]
    %v43 = vld [vmem:[%s1] sm:$0xff]
    %v44 = vld [vmem:[%s1 + $0x8] sm:$0xff]
    %v45 = vld [vmem:[%s1 + $0x10] sm:$0xff]
    %v46 = vld [vmem:[%s1 + $0x18] sm:$0xff]
    %v47 = vld [vmem:[%s1 + $0x20] sm:$0xff]
    %v48 = vld [vmem:[%s1 + $0x28] sm:$0xff]
    %v49 = vld [vmem:[%s1 + $0x30] sm:$0xff]
    %v50 = vld [vmem:[%s1 + $0x38] sm:$0xff]
    %v51 = vld [vmem:[%s1 + $0x40] sm:$0xff]
    %v52 = vld [vmem:[%s1 + $0x48] sm:$0xff]
    %v53 = vld [vmem:[%s1 + $0x50] sm:$0xff]
    %v54 = vld [vmem:[%s1 + $0x58] sm:$0xff]
    %v55 = vld [vmem:[%s1 + $0x60] sm:$0xff]
    %v56 = vld [vmem:[%s1 + $0x68] sm:$0xff]
    %v57 = vld [vmem:[%s1 + $0x70] sm:$0xff]
    %v58 = vld [vmem:[%s1 + $0x78] sm:$0xff]
    %v59 = vld [vmem:[%s2] sm:$0xff]
    %v60 = vld [vmem:[%s2 + $0x8] sm:$0xff]
    %v61 = vld [vmem:[%s2 + $0x10] sm:$0xff]
    %v62 = vld [vmem:[%s2 + $0x18] sm:$0xff]
    %v63 = vld [vmem:[%s3] sm:$0xff]
    %v64 = vld [vmem:[%s3 + $0x8] sm:$0xff]
    %v65 = vld [vmem:[%s3 + $0x10] sm:$0xff]
    %v66 = vld [vmem:[%s3 + $0x18] sm:$0xff]
    %vm67 = vcmask 261120
    %v69 = vsel %vm67, %v43, 0
    %v72 = vsel %vm67, %v44, 0
    %v75 = vsel %vm67, %v45, 0
    %v78 = vsel %vm67, %v46, 0
    %v81 = vsel %vm67, %v47, 0
    %v84 = vsel %vm67, %v48, 0
    %v87 = vsel %vm67, %v49, 0
    %v90 = vsel %vm67, %v50, 0
    %v93 = vsel %vm67, %v51, 0
    %v96 = vsel %vm67, %v52, 0
    %v99 = vsel %vm67, %v53, 0
    %v102 = vsel %vm67, %v54, 0
    %v105 = vsel %vm67, %v55, 0
    %v108 = vsel %vm67, %v56, 0
    %v111 = vsel %vm67, %v57, 0
    %v114 = vsel %vm67, %v58, 0
    %116 = vmatpush.msra.mxu0 0.0
    %117 = vmatpush.msra.mxu0 0.0
    %118 = vmatpush.msra.mxu0 0.0
    %119 = vmatpush.msra.mxu0 0.0
    %120 = vmatpush.msra.mxu0 0.0
    %121 = vmatpush.msra.mxu0 0.0
    %122 = vmatpush.msra.mxu0 0.0
    %123 = vmatpush.msra.mxu0 0.0
    %124 = vmatpush.msra.mxu0 0.0
    %125 = vmatpush.msra.mxu0 0.0
    %126 = vmatpush.msra.mxu0 0.0
    %127 = vmatpush.msra.mxu0 0.0
    %128 = vmatpush.msra.mxu0 %v66
    %129 = vmatpush.msra.mxu0 %v65
    %130 = vmatpush.msra.mxu0 %v64
    %131 = vmatpush.msra.mxu0 %v63
    %132 = vmatmul.f32.gmra.mxu0 %v69
    %v133 = vpop.f32.mrf.mxu0
    %v134 = vadd.f32 0.0, %v133
    %135 = vmatmul.f32.gmra.mxu0 %v72
    %v136 = vpop.f32.mrf.mxu0
    %v137 = vadd.f32 0.0, %v136
    %138 = vmatmul.f32.gmra.mxu0 %v75
    %v139 = vpop.f32.mrf.mxu0
    %v140 = vadd.f32 0.0, %v139
    %141 = vmatmul.f32.gmra.mxu0 %v78
    %v142 = vpop.f32.mrf.mxu0
    %v143 = vadd.f32 0.0, %v142
    %144 = vmatmul.f32.gmra.mxu0 %v81
    %v145 = vpop.f32.mrf.mxu0
    %v146 = vadd.f32 0.0, %v145
    %147 = vmatmul.f32.gmra.mxu0 %v84
    %v148 = vpop.f32.mrf.mxu0
    %v149 = vadd.f32 0.0, %v148
    %150 = vmatmul.f32.gmra.mxu0 %v87
    %v151 = vpop.f32.mrf.mxu0
    %v152 = vadd.f32 0.0, %v151
    %153 = vmatmul.f32.gmra.mxu0 %v90
    %v154 = vpop.f32.mrf.mxu0
    %v155 = vadd.f32 0.0, %v154
    %156 = vmatmul.f32.gmra.mxu0 %v93
    %v157 = vpop.f32.mrf.mxu0
    %v158 = vadd.f32 0.0, %v157
    %159 = vmatmul.f32.gmra.mxu0 %v96
    %v160 = vpop.f32.mrf.mxu0
    %v161 = vadd.f32 0.0, %v160
    %162 = vmatmul.f32.gmra.mxu0 %v99
    %v163 = vpop.f32.mrf.mxu0
    %v164 = vadd.f32 0.0, %v163
    %165 = vmatmul.f32.gmra.mxu0 %v102
    %v166 = vpop.f32.mrf.mxu0
    %v167 = vadd.f32 0.0, %v166
    %168 = vmatmul.f32.gmra.mxu0 %v105
    %v169 = vpop.f32.mrf.mxu0
    %v170 = vadd.f32 0.0, %v169
    %171 = vmatmul.f32.gmra.mxu0 %v108
    %v172 = vpop.f32.mrf.mxu0
    %v173 = vadd.f32 0.0, %v172
    %174 = vmatmul.f32.gmra.mxu0 %v111
    %v175 = vpop.f32.mrf.mxu0
    %v176 = vadd.f32 0.0, %v175
    %177 = vmatmul.f32.gmra.mxu0 %v114
    %v178 = vpop.f32.mrf.mxu0
    %v179 = vadd.f32 0.0, %v178
    %180 = vdwg.mxu0
    %v182 = vsel %vm67, %v27, 0
    %v185 = vsel %vm67, %v28, 0
    %v188 = vsel %vm67, %v29, 0
    %v191 = vsel %vm67, %v30, 0
    %v194 = vsel %vm67, %v31, 0
    %v197 = vsel %vm67, %v32, 0
    %v200 = vsel %vm67, %v33, 0
    %v203 = vsel %vm67, %v34, 0
    %v206 = vsel %vm67, %v35, 0
    %v209 = vsel %vm67, %v36, 0
    %v212 = vsel %vm67, %v37, 0
    %v215 = vsel %vm67, %v38, 0
    %v218 = vsel %vm67, %v39, 0
    %v221 = vsel %vm67, %v40, 0
    %v224 = vsel %vm67, %v41, 0
    %v227 = vsel %vm67, %v42, 0
    %229 = vmatpush.msra.mxu0 0.0
    %230 = vmatpush.msra.mxu0 0.0
    %231 = vmatpush.msra.mxu0 0.0
    %232 = vmatpush.msra.mxu0 0.0
    %233 = vmatpush.msra.mxu0 0.0
    %234 = vmatpush.msra.mxu0 0.0
    %235 = vmatpush.msra.mxu0 0.0
    %236 = vmatpush.msra.mxu0 0.0
    %237 = vmatpush.msra.mxu0 0.0
    %238 = vmatpush.msra.mxu0 0.0
    %239 = vmatpush.msra.mxu0 0.0
    %240 = vmatpush.msra.mxu0 0.0
    %241 = vmatpush.msra.mxu0 %v62
    %242 = vmatpush.msra.mxu0 %v61
    %243 = vmatpush.msra.mxu0 %v60
    %244 = vmatpush.msra.mxu0 %v59
    %245 = vmatmul.f32.gmra.mxu0 %v182
    %v246 = vpop.f32.mrf.mxu0
    %v247 = vadd.f32 %v134, %v246
    %248 = vmatmul.f32.gmra.mxu0 %v185
    %v249 = vpop.f32.mrf.mxu0
    %v250 = vadd.f32 %v137, %v249
    %251 = vmatmul.f32.gmra.mxu0 %v188
    %v252 = vpop.f32.mrf.mxu0
    %v253 = vadd.f32 %v140, %v252
    %254 = vmatmul.f32.gmra.mxu0 %v191
    %v255 = vpop.f32.mrf.mxu0
    %v256 = vadd.f32 %v143, %v255
    %257 = vmatmul.f32.gmra.mxu0 %v194
    %v258 = vpop.f32.mrf.mxu0
    %v259 = vadd.f32 %v146, %v258
    %260 = vmatmul.f32.gmra.mxu0 %v197
    %v261 = vpop.f32.mrf.mxu0
    %v262 = vadd.f32 %v149, %v261
    %263 = vmatmul.f32.gmra.mxu0 %v200
    %v264 = vpop.f32.mrf.mxu0
    %v265 = vadd.f32 %v152, %v264
    %266 = vmatmul.f32.gmra.mxu0 %v203
    %v267 = vpop.f32.mrf.mxu0
    %v268 = vadd.f32 %v155, %v267
    %269 = vmatmul.f32.gmra.mxu0 %v206
    %v270 = vpop.f32.mrf.mxu0
    %v271 = vadd.f32 %v158, %v270
    %272 = vmatmul.f32.gmra.mxu0 %v209
    %v273 = vpop.f32.mrf.mxu0
    %v274 = vadd.f32 %v161, %v273
    %275 = vmatmul.f32.gmra.mxu0 %v212
    %v276 = vpop.f32.mrf.mxu0
    %v277 = vadd.f32 %v164, %v276
    %278 = vmatmul.f32.gmra.mxu0 %v215
    %v279 = vpop.f32.mrf.mxu0
    %v280 = vadd.f32 %v167, %v279
    %281 = vmatmul.f32.gmra.mxu0 %v218
    %v282 = vpop.f32.mrf.mxu0
    %v283 = vadd.f32 %v170, %v282
    %284 = vmatmul.f32.gmra.mxu0 %v221
    %v285 = vpop.f32.mrf.mxu0
    %v286 = vadd.f32 %v173, %v285
    %287 = vmatmul.f32.gmra.mxu0 %v224
    %v288 = vpop.f32.mrf.mxu0
    %v289 = vadd.f32 %v176, %v288
    %290 = vmatmul.f32.gmra.mxu0 %v227
    %v291 = vpop.f32.mrf.mxu0
    %v292 = vadd.f32 %v179, %v291
    %293 = vdwg.mxu0
    %v294 = vld [vmem:[%s5] sm:$0x1]
    %v296 = vperm.slane %v294, 0
    %v298 = vadd.f32 %v247, %v296
    %v299 = vadd.f32 %v250, %v296
    %v300 = vadd.f32 %v253, %v296
    %v301 = vadd.f32 %v256, %v296
    %v302 = vadd.f32 %v259, %v296
    %v303 = vadd.f32 %v262, %v296
    %v304 = vadd.f32 %v265, %v296
    %v305 = vadd.f32 %v268, %v296
    %v306 = vadd.f32 %v271, %v296
    %v307 = vadd.f32 %v274, %v296
    %v308 = vadd.f32 %v277, %v296
    %v309 = vadd.f32 %v280, %v296
    %v310 = vadd.f32 %v283, %v296
    %v311 = vadd.f32 %v286, %v296
    %v312 = vadd.f32 %v289, %v296
    %v313 = vadd.f32 %v292, %v296
    %v314 = vld [vmem:[%s4] sm:$0xff]
    %v315 = vld [vmem:[%s4 + $0x8] sm:$0xff]
    %v316 = vld [vmem:[%s4 + $0x10] sm:$0xff]
    %v317 = vld [vmem:[%s4 + $0x18] sm:$0xff]
    %v318 = vld [vmem:[%s6] sm:$0x1]
    %v320 = vperm.slane %v318, 0
    %322 = vmatpush.msra.mxu0 0.0
    %323 = vmatpush.msra.mxu0 0.0
    %324 = vmatpush.msra.mxu0 0.0
    %325 = vmatpush.msra.mxu0 0.0
    %326 = vmatpush.msra.mxu0 0.0
    %327 = vmatpush.msra.mxu0 0.0
    %328 = vmatpush.msra.mxu0 0.0
    %329 = vmatpush.msra.mxu0 0.0
    %330 = vmatpush.msra.mxu0 0.0
    %331 = vmatpush.msra.mxu0 0.0
    %332 = vmatpush.msra.mxu0 0.0
    %333 = vmatpush.msra.mxu0 0.0
    %334 = vmatpush.msra.mxu0 %v317
    %335 = vmatpush.msra.mxu0 %v316
    %336 = vmatpush.msra.mxu0 %v315
    %337 = vmatpush.msra.mxu0 %v314
    %338 = vmatmul.f32.gmra.mxu0 %v69
    %v339 = vpop.f32.mrf.mxu0
    %v340 = vadd.f32 %v320, %v339
    %341 = vmatmul.f32.gmra.mxu0 %v72
    %v342 = vpop.f32.mrf.mxu0
    %v343 = vadd.f32 %v320, %v342
    %344 = vmatmul.f32.gmra.mxu0 %v75
    %v345 = vpop.f32.mrf.mxu0
    %v346 = vadd.f32 %v320, %v345
    %347 = vmatmul.f32.gmra.mxu0 %v78
    %v348 = vpop.f32.mrf.mxu0
    %v349 = vadd.f32 %v320, %v348
    %350 = vmatmul.f32.gmra.mxu0 %v81
    %v351 = vpop.f32.mrf.mxu0
    %v352 = vadd.f32 %v320, %v351
    %353 = vmatmul.f32.gmra.mxu0 %v84
    %v354 = vpop.f32.mrf.mxu0
    %v355 = vadd.f32 %v320, %v354
    %356 = vmatmul.f32.gmra.mxu0 %v87
    %v357 = vpop.f32.mrf.mxu0
    %v358 = vadd.f32 %v320, %v357
    %359 = vmatmul.f32.gmra.mxu0 %v90
    %v360 = vpop.f32.mrf.mxu0
    %v361 = vadd.f32 %v320, %v360
    %362 = vmatmul.f32.gmra.mxu0 %v93
    %v363 = vpop.f32.mrf.mxu0
    %v364 = vadd.f32 %v320, %v363
    %365 = vmatmul.f32.gmra.mxu0 %v96
    %v366 = vpop.f32.mrf.mxu0
    %v367 = vadd.f32 %v320, %v366
    %368 = vmatmul.f32.gmra.mxu0 %v99
    %v369 = vpop.f32.mrf.mxu0
    %v370 = vadd.f32 %v320, %v369
    %371 = vmatmul.f32.gmra.mxu0 %v102
    %v372 = vpop.f32.mrf.mxu0
    %v373 = vadd.f32 %v320, %v372
    %374 = vmatmul.f32.gmra.mxu0 %v105
    %v375 = vpop.f32.mrf.mxu0
    %v376 = vadd.f32 %v320, %v375
    %377 = vmatmul.f32.gmra.mxu0 %v108
    %v378 = vpop.f32.mrf.mxu0
    %v379 = vadd.f32 %v320, %v378
    %380 = vmatmul.f32.gmra.mxu0 %v111
    %v381 = vpop.f32.mrf.mxu0
    %v382 = vadd.f32 %v320, %v381
    %383 = vmatmul.f32.gmra.mxu0 %v114
    %v384 = vpop.f32.mrf.mxu0
    %v385 = vadd.f32 %v320, %v384
    %386 = vdwg.mxu0
    %s387 = smul.u32 0, 128
    %v388 = vlaneseq
    %v389 = vshrl.u32 %v388, 7
    %v390 = vadd.s32 %v389, 8
    %v391 = vadd.s32 %v389, 16
    %v392 = vadd.s32 %v389, 24
    %v393 = vadd.s32 %v389, 32
    %v394 = vadd.s32 %v389, 40
    %v395 = vadd.s32 %v389, 48
    %v396 = vadd.s32 %v389, 56
    %v397 = vadd.s32 %v389, 64
    %v398 = vadd.s32 %v389, 72
    %v399 = vadd.s32 %v389, 80
    %v400 = vadd.s32 %v389, 88
    %v401 = vadd.s32 %v389, 96
    %v402 = vadd.s32 %v389, 104
    %v403 = vadd.s32 %v389, 112
    %v404 = vadd.s32 %v389, 120
    %v405 = vstv %s387
    %v406 = vadd.s32 %v389, %v405
    %v407 = vadd.s32 %v390, %v405
    %v408 = vadd.s32 %v391, %v405
    %v409 = vadd.s32 %v392, %v405
    %v410 = vadd.s32 %v393, %v405
    %v411 = vadd.s32 %v394, %v405
    %v412 = vadd.s32 %v395, %v405
    %v413 = vadd.s32 %v396, %v405
    %v414 = vadd.s32 %v397, %v405
    %v415 = vadd.s32 %v398, %v405
    %v416 = vadd.s32 %v399, %v405
    %v417 = vadd.s32 %v400, %v405
    %v418 = vadd.s32 %v401, %v405
    %v419 = vadd.s32 %v402, %v405
    %v420 = vadd.s32 %v403, %v405
    %v421 = vadd.s32 %v404, %v405
    %v422 = vcvt.s32.f32 %v406
    %v423 = vcvt.s32.f32 %v407
    %v424 = vcvt.s32.f32 %v408
    %v425 = vcvt.s32.f32 %v409
    %v426 = vcvt.s32.f32 %v410
    %v427 = vcvt.s32.f32 %v411
    %v428 = vcvt.s32.f32 %v412
    %v429 = vcvt.s32.f32 %v413
    %v430 = vcvt.s32.f32 %v414
    %v431 = vcvt.s32.f32 %v415
    %v432 = vcvt.s32.f32 %v416
    %v433 = vcvt.s32.f32 %v417
    %v434 = vcvt.s32.f32 %v418
    %v435 = vcvt.s32.f32 %v419
    %v436 = vcvt.s32.f32 %v420
    %v437 = vcvt.s32.f32 %v421
    %v438 = vadd.f32 %v422, 0.5
    %v439 = vadd.f32 %v423, 0.5
    %v440 = vadd.f32 %v424, 0.5
    %v441 = vadd.f32 %v425, 0.5
    %v442 = vadd.f32 %v426, 0.5
    %v443 = vadd.f32 %v427, 0.5
    %v444 = vadd.f32 %v428, 0.5
    %v445 = vadd.f32 %v429, 0.5
    %v446 = vadd.f32 %v430, 0.5
    %v447 = vadd.f32 %v431, 0.5
    %v448 = vadd.f32 %v432, 0.5
    %v449 = vadd.f32 %v433, 0.5
    %v450 = vadd.f32 %v434, 0.5
    %v451 = vadd.f32 %v435, 0.5
    %v452 = vadd.f32 %v436, 0.5
    %v453 = vadd.f32 %v437, 0.5
    %v454 = vmul.f32 %v438, 0.015625
    %v455 = vmul.f32 %v439, 0.015625
    %v456 = vmul.f32 %v440, 0.015625
    %v457 = vmul.f32 %v441, 0.015625
    %v458 = vmul.f32 %v442, 0.015625
    %v459 = vmul.f32 %v443, 0.015625
    %v460 = vmul.f32 %v444, 0.015625
    %v461 = vmul.f32 %v445, 0.015625
    %v462 = vmul.f32 %v446, 0.015625
    %v463 = vmul.f32 %v447, 0.015625
    %v464 = vmul.f32 %v448, 0.015625
    %v465 = vmul.f32 %v449, 0.015625
    %v466 = vmul.f32 %v450, 0.015625
    %v467 = vmul.f32 %v451, 0.015625
    %v468 = vmul.f32 %v452, 0.015625
    %v469 = vmul.f32 %v453, 0.015625
    %v470 = vcvt.f32.s32.to.zero.pseudo %v454
    %v471 = vcvt.f32.s32.to.zero.pseudo %v455
    %v472 = vcvt.f32.s32.to.zero.pseudo %v456
    %v473 = vcvt.f32.s32.to.zero.pseudo %v457
    %v474 = vcvt.f32.s32.to.zero.pseudo %v458
    %v475 = vcvt.f32.s32.to.zero.pseudo %v459
    %v476 = vcvt.f32.s32.to.zero.pseudo %v460
    %v477 = vcvt.f32.s32.to.zero.pseudo %v461
    %v478 = vcvt.f32.s32.to.zero.pseudo %v462
    %v479 = vcvt.f32.s32.to.zero.pseudo %v463
    %v480 = vcvt.f32.s32.to.zero.pseudo %v464
    %v481 = vcvt.f32.s32.to.zero.pseudo %v465
    %v482 = vcvt.f32.s32.to.zero.pseudo %v466
    %v483 = vcvt.f32.s32.to.zero.pseudo %v467
    %v484 = vcvt.f32.s32.to.zero.pseudo %v468
    %v485 = vcvt.f32.s32.to.zero.pseudo %v469
    %v486 = vcvt.s32.f32 %v470
    %v487 = vcvt.s32.f32 %v471
    %v488 = vcvt.s32.f32 %v472
    %v489 = vcvt.s32.f32 %v473
    %v490 = vcvt.s32.f32 %v474
    %v491 = vcvt.s32.f32 %v475
    %v492 = vcvt.s32.f32 %v476
    %v493 = vcvt.s32.f32 %v477
    %v494 = vcvt.s32.f32 %v478
    %v495 = vcvt.s32.f32 %v479
    %v496 = vcvt.s32.f32 %v480
    %v497 = vcvt.s32.f32 %v481
    %v498 = vcvt.s32.f32 %v482
    %v499 = vcvt.s32.f32 %v483
    %v500 = vcvt.s32.f32 %v484
    %v501 = vcvt.s32.f32 %v485
    %v502 = vmul.f32 %v486, 64.0
    %v503 = vmul.f32 %v487, 64.0
    %v504 = vmul.f32 %v488, 64.0
    %v505 = vmul.f32 %v489, 64.0
    %v506 = vmul.f32 %v490, 64.0
    %v507 = vmul.f32 %v491, 64.0
    %v508 = vmul.f32 %v492, 64.0
    %v509 = vmul.f32 %v493, 64.0
    %v510 = vmul.f32 %v494, 64.0
    %v511 = vmul.f32 %v495, 64.0
    %v512 = vmul.f32 %v496, 64.0
    %v513 = vmul.f32 %v497, 64.0
    %v514 = vmul.f32 %v498, 64.0
    %v515 = vmul.f32 %v499, 64.0
    %v516 = vmul.f32 %v500, 64.0
    %v517 = vmul.f32 %v501, 64.0
    %v518 = vsub.f32 %v422, %v502
    %v519 = vsub.f32 %v423, %v503
    %v520 = vsub.f32 %v424, %v504
    %v521 = vsub.f32 %v425, %v505
    %v522 = vsub.f32 %v426, %v506
    %v523 = vsub.f32 %v427, %v507
    %v524 = vsub.f32 %v428, %v508
    %v525 = vsub.f32 %v429, %v509
    %v526 = vsub.f32 %v430, %v510
    %v527 = vsub.f32 %v431, %v511
    %v528 = vsub.f32 %v432, %v512
    %v529 = vsub.f32 %v433, %v513
    %v530 = vsub.f32 %v434, %v514
    %v531 = vsub.f32 %v435, %v515
    %v532 = vsub.f32 %v436, %v516
    %v533 = vsub.f32 %v437, %v517
    %v534 = vadd.f32 %v518, 0.5
    %v535 = vadd.f32 %v519, 0.5
    %v536 = vadd.f32 %v520, 0.5
    %v537 = vadd.f32 %v521, 0.5
    %v538 = vadd.f32 %v522, 0.5
    %v539 = vadd.f32 %v523, 0.5
    %v540 = vadd.f32 %v524, 0.5
    %v541 = vadd.f32 %v525, 0.5
    %v542 = vadd.f32 %v526, 0.5
    %v543 = vadd.f32 %v527, 0.5
    %v544 = vadd.f32 %v528, 0.5
    %v545 = vadd.f32 %v529, 0.5
    %v546 = vadd.f32 %v530, 0.5
    %v547 = vadd.f32 %v531, 0.5
    %v548 = vadd.f32 %v532, 0.5
    %v549 = vadd.f32 %v533, 0.5
    %v550 = vmul.f32 %v534, 0.125
    %v551 = vmul.f32 %v535, 0.125
    %v552 = vmul.f32 %v536, 0.125
    %v553 = vmul.f32 %v537, 0.125
    %v554 = vmul.f32 %v538, 0.125
    %v555 = vmul.f32 %v539, 0.125
    %v556 = vmul.f32 %v540, 0.125
    %v557 = vmul.f32 %v541, 0.125
    %v558 = vmul.f32 %v542, 0.125
    %v559 = vmul.f32 %v543, 0.125
    %v560 = vmul.f32 %v544, 0.125
    %v561 = vmul.f32 %v545, 0.125
    %v562 = vmul.f32 %v546, 0.125
    %v563 = vmul.f32 %v547, 0.125
    %v564 = vmul.f32 %v548, 0.125
    %v565 = vmul.f32 %v549, 0.125
    %v566 = vcvt.f32.s32.to.zero.pseudo %v550
    %v567 = vcvt.f32.s32.to.zero.pseudo %v551
    %v568 = vcvt.f32.s32.to.zero.pseudo %v552
    %v569 = vcvt.f32.s32.to.zero.pseudo %v553
    %v570 = vcvt.f32.s32.to.zero.pseudo %v554
    %v571 = vcvt.f32.s32.to.zero.pseudo %v555
    %v572 = vcvt.f32.s32.to.zero.pseudo %v556
    %v573 = vcvt.f32.s32.to.zero.pseudo %v557
    %v574 = vcvt.f32.s32.to.zero.pseudo %v558
    %v575 = vcvt.f32.s32.to.zero.pseudo %v559
    %v576 = vcvt.f32.s32.to.zero.pseudo %v560
    %v577 = vcvt.f32.s32.to.zero.pseudo %v561
    %v578 = vcvt.f32.s32.to.zero.pseudo %v562
    %v579 = vcvt.f32.s32.to.zero.pseudo %v563
    %v580 = vcvt.f32.s32.to.zero.pseudo %v564
    %v581 = vcvt.f32.s32.to.zero.pseudo %v565
    %v582 = vcvt.s32.f32 %v566
    %v583 = vcvt.s32.f32 %v567
    %v584 = vcvt.s32.f32 %v568
    %v585 = vcvt.s32.f32 %v569
    %v586 = vcvt.s32.f32 %v570
    %v587 = vcvt.s32.f32 %v571
    %v588 = vcvt.s32.f32 %v572
    %v589 = vcvt.s32.f32 %v573
    %v590 = vcvt.s32.f32 %v574
    %v591 = vcvt.s32.f32 %v575
    %v592 = vcvt.s32.f32 %v576
    %v593 = vcvt.s32.f32 %v577
    %v594 = vcvt.s32.f32 %v578
    %v595 = vcvt.s32.f32 %v579
    %v596 = vcvt.s32.f32 %v580
    %v597 = vcvt.s32.f32 %v581
    %v598 = vmul.f32 %v582, 8.0
    %v599 = vmul.f32 %v583, 8.0
    %v600 = vmul.f32 %v584, 8.0
    %v601 = vmul.f32 %v585, 8.0
    %v602 = vmul.f32 %v586, 8.0
    %v603 = vmul.f32 %v587, 8.0
    %v604 = vmul.f32 %v588, 8.0
    %v605 = vmul.f32 %v589, 8.0
    %v606 = vmul.f32 %v590, 8.0
    %v607 = vmul.f32 %v591, 8.0
    %v608 = vmul.f32 %v592, 8.0
    %v609 = vmul.f32 %v593, 8.0
    %v610 = vmul.f32 %v594, 8.0
    %v611 = vmul.f32 %v595, 8.0
    %v612 = vmul.f32 %v596, 8.0
    %v613 = vmul.f32 %v597, 8.0
    %v614 = vsub.f32 %v518, %v598
    %v615 = vsub.f32 %v519, %v599
    %v616 = vsub.f32 %v520, %v600
    %v617 = vsub.f32 %v521, %v601
    %v618 = vsub.f32 %v522, %v602
    %v619 = vsub.f32 %v523, %v603
    %v620 = vsub.f32 %v524, %v604
    %v621 = vsub.f32 %v525, %v605
    %v622 = vsub.f32 %v526, %v606
    %v623 = vsub.f32 %v527, %v607
    %v624 = vsub.f32 %v528, %v608
    %v625 = vsub.f32 %v529, %v609
    %v626 = vsub.f32 %v530, %v610
    %v627 = vsub.f32 %v531, %v611
    %v628 = vsub.f32 %v532, %v612
    %v629 = vsub.f32 %v533, %v613
    %v630 = vlaneseq
    %v631 = vand.u32 %v630, 127
    %v632 = vsub.s32 %v631, 84
    %v633 = vand.u32 %v632, 1
    %vm634 = vcmp.eq.s32.totalorder %v633, 0
    %v635 = vadd.f32 %v614, 0.5
    %v636 = vadd.f32 %v615, 0.5
    %v637 = vadd.f32 %v616, 0.5
    %v638 = vadd.f32 %v617, 0.5
    %v639 = vadd.f32 %v618, 0.5
    %v640 = vadd.f32 %v619, 0.5
    %v641 = vadd.f32 %v620, 0.5
    %v642 = vadd.f32 %v621, 0.5
    %v643 = vadd.f32 %v622, 0.5
    %v644 = vadd.f32 %v623, 0.5
    %v645 = vadd.f32 %v624, 0.5
    %v646 = vadd.f32 %v625, 0.5
    %v647 = vadd.f32 %v626, 0.5
    %v648 = vadd.f32 %v627, 0.5
    %v649 = vadd.f32 %v628, 0.5
    %v650 = vadd.f32 %v629, 0.5
    %v651 = vmul.f32 %v635, 8.0
    %v652 = vmul.f32 %v636, 8.0
    %v653 = vmul.f32 %v637, 8.0
    %v654 = vmul.f32 %v638, 8.0
    %v655 = vmul.f32 %v639, 8.0
    %v656 = vmul.f32 %v640, 8.0
    %v657 = vmul.f32 %v641, 8.0
    %v658 = vmul.f32 %v642, 8.0
    %v659 = vmul.f32 %v643, 8.0
    %v660 = vmul.f32 %v644, 8.0
    %v661 = vmul.f32 %v645, 8.0
    %v662 = vmul.f32 %v646, 8.0
    %v663 = vmul.f32 %v647, 8.0
    %v664 = vmul.f32 %v648, 8.0
    %v665 = vmul.f32 %v649, 8.0
    %v666 = vmul.f32 %v650, 8.0
    %v667 = vadd.f32 %v582, 0.5
    %v668 = vadd.f32 %v583, 0.5
    %v669 = vadd.f32 %v584, 0.5
    %v670 = vadd.f32 %v585, 0.5
    %v671 = vadd.f32 %v586, 0.5
    %v672 = vadd.f32 %v587, 0.5
    %v673 = vadd.f32 %v588, 0.5
    %v674 = vadd.f32 %v589, 0.5
    %v675 = vadd.f32 %v590, 0.5
    %v676 = vadd.f32 %v591, 0.5
    %v677 = vadd.f32 %v592, 0.5
    %v678 = vadd.f32 %v593, 0.5
    %v679 = vadd.f32 %v594, 0.5
    %v680 = vadd.f32 %v595, 0.5
    %v681 = vadd.f32 %v596, 0.5
    %v682 = vadd.f32 %v597, 0.5
    %v683 = vmul.f32 %v667, 8.0
    %v684 = vmul.f32 %v668, 8.0
    %v685 = vmul.f32 %v669, 8.0
    %v686 = vmul.f32 %v670, 8.0
    %v687 = vmul.f32 %v671, 8.0
    %v688 = vmul.f32 %v672, 8.0
    %v689 = vmul.f32 %v673, 8.0
    %v690 = vmul.f32 %v674, 8.0
    %v691 = vmul.f32 %v675, 8.0
    %v692 = vmul.f32 %v676, 8.0
    %v693 = vmul.f32 %v677, 8.0
    %v694 = vmul.f32 %v678, 8.0
    %v695 = vmul.f32 %v679, 8.0
    %v696 = vmul.f32 %v680, 8.0
    %v697 = vmul.f32 %v681, 8.0
    %v698 = vmul.f32 %v682, 8.0
    %v699 = vsel %vm634, %v651, %v683
    %v700 = vsel %vm634, %v652, %v684
    %v701 = vsel %vm634, %v653, %v685
    %v702 = vsel %vm634, %v654, %v686
    %v703 = vsel %vm634, %v655, %v687
    %v704 = vsel %vm634, %v656, %v688
    %v705 = vsel %vm634, %v657, %v689
    %v706 = vsel %vm634, %v658, %v690
    %v707 = vsel %vm634, %v659, %v691
    %v708 = vsel %vm634, %v660, %v692
    %v709 = vsel %vm634, %v661, %v693
    %v710 = vsel %vm634, %v662, %v694
    %v711 = vsel %vm634, %v663, %v695
    %v712 = vsel %vm634, %v664, %v696
    %v713 = vsel %vm634, %v665, %v697
    %v714 = vsel %vm634, %v666, %v698
    %vm715 = vcmp.lt.s32.totalorder %v631, 86
    %v716 = vsel %vm715, -4.0, 4.0
    %vm717 = vcmp.ge.s32.totalorder %v631, 84
    %vm718 = vcmp.lt.s32.totalorder %v631, 88
    %vm719 = vmand %vm717, %vm718
    %v720 = vmul.f32 %v340, 1.442695
    %v721 = vpow.pop %v720
    %v722 = vmul.f32 %v343, 1.442695
    %v723 = vpow.pop %v722
    %v724 = vmul.f32 %v346, 1.442695
    %v725 = vpow.pop %v724
    %v726 = vmul.f32 %v349, 1.442695
    %v727 = vpow.pop %v726
    %v728 = vmul.f32 %v352, 1.442695
    %v729 = vpow.pop %v728
    %v730 = vmul.f32 %v355, 1.442695
    %v731 = vpow.pop %v730
    %v732 = vmul.f32 %v358, 1.442695
    %v733 = vpow.pop %v732
    %v734 = vmul.f32 %v361, 1.442695
    %v735 = vpow.pop %v734
    %v736 = vmul.f32 %v364, 1.442695
    %v737 = vpow.pop %v736
    %v738 = vmul.f32 %v367, 1.442695
    %v739 = vpow.pop %v738
    %v740 = vmul.f32 %v370, 1.442695
    %v741 = vpow.pop %v740
    %v742 = vmul.f32 %v373, 1.442695
    %v743 = vpow.pop %v742
    %v744 = vmul.f32 %v376, 1.442695
    %v745 = vpow.pop %v744
    %v746 = vmul.f32 %v379, 1.442695
    %v747 = vpow.pop %v746
    %v748 = vmul.f32 %v382, 1.442695
    %v749 = vpow.pop %v748
    %v750 = vmul.f32 %v385, 1.442695
    %v751 = vpow.pop %v750
    %v752 = vmul.f32 %v716, %v721
    %v753 = vmul.f32 %v716, %v723
    %v754 = vmul.f32 %v716, %v725
    %v755 = vmul.f32 %v716, %v727
    %v756 = vmul.f32 %v716, %v729
    %v757 = vmul.f32 %v716, %v731
    %v758 = vmul.f32 %v716, %v733
    %v759 = vmul.f32 %v716, %v735
    %v760 = vmul.f32 %v716, %v737
    %v761 = vmul.f32 %v716, %v739
    %v762 = vmul.f32 %v716, %v741
    %v763 = vmul.f32 %v716, %v743
    %v764 = vmul.f32 %v716, %v745
    %v765 = vmul.f32 %v716, %v747
    %v766 = vmul.f32 %v716, %v749
    %v767 = vmul.f32 %v716, %v751
    %v768 = vadd.f32 %v699, %v752
    %v769 = vadd.f32 %v700, %v753
    %v770 = vadd.f32 %v701, %v754
    %v771 = vadd.f32 %v702, %v755
    %v772 = vadd.f32 %v703, %v756
    %v773 = vadd.f32 %v704, %v757
    %v774 = vadd.f32 %v705, %v758
    %v775 = vadd.f32 %v706, %v759
    %v776 = vadd.f32 %v707, %v760
    %v777 = vadd.f32 %v708, %v761
    %v778 = vadd.f32 %v709, %v762
    %v779 = vadd.f32 %v710, %v763
    %v780 = vadd.f32 %v711, %v764
    %v781 = vadd.f32 %v712, %v765
    %v782 = vadd.f32 %v713, %v766
    %v783 = vadd.f32 %v714, %v767
    %v784 = vsel %vm719, %v768, 0.0
    %v785 = vsel %vm719, %v769, 0.0
    %v786 = vsel %vm719, %v770, 0.0
    %v787 = vsel %vm719, %v771, 0.0
    %v788 = vsel %vm719, %v772, 0.0
    %v789 = vsel %vm719, %v773, 0.0
    %v790 = vsel %vm719, %v774, 0.0
    %v791 = vsel %vm719, %v775, 0.0
    %v792 = vsel %vm719, %v776, 0.0
    %v793 = vsel %vm719, %v777, 0.0
    %v794 = vsel %vm719, %v778, 0.0
    %v795 = vsel %vm719, %v779, 0.0
    %v796 = vsel %vm719, %v780, 0.0
    %v797 = vsel %vm719, %v781, 0.0
    %v798 = vsel %vm719, %v782, 0.0
    %v799 = vsel %vm719, %v783, 0.0
    %v800 = vadd.f32 %v298, %v784
    %v801 = vadd.f32 %v299, %v785
    %v802 = vadd.f32 %v300, %v786
    %v803 = vadd.f32 %v301, %v787
    %v804 = vadd.f32 %v302, %v788
    %v805 = vadd.f32 %v303, %v789
    %v806 = vadd.f32 %v304, %v790
    %v807 = vadd.f32 %v305, %v791
    %v808 = vadd.f32 %v306, %v792
    %v809 = vadd.f32 %v307, %v793
    %v810 = vadd.f32 %v308, %v794
    %v811 = vadd.f32 %v309, %v795
    %v812 = vadd.f32 %v310, %v796
    %v813 = vadd.f32 %v311, %v797
    %v814 = vadd.f32 %v312, %v798
    %v815 = vadd.f32 %v313, %v799
    %816 = vst [vmem:[#allocation2] sm:$0xff] %v800
    %817 = vst [vmem:[#allocation2 + $0x8] sm:$0xff] %v801
    %818 = vst [vmem:[#allocation2 + $0x10] sm:$0xff] %v802
    %819 = vst [vmem:[#allocation2 + $0x18] sm:$0xff] %v803
    %820 = vst [vmem:[#allocation2 + $0x20] sm:$0xff] %v804
    %821 = vst [vmem:[#allocation2 + $0x28] sm:$0xff] %v805
    %822 = vst [vmem:[#allocation2 + $0x30] sm:$0xff] %v806
    %823 = vst [vmem:[#allocation2 + $0x38] sm:$0xff] %v807
    %824 = vst [vmem:[#allocation2 + $0x40] sm:$0xff] %v808
    %825 = vst [vmem:[#allocation2 + $0x48] sm:$0xff] %v809
    %826 = vst [vmem:[#allocation2 + $0x50] sm:$0xff] %v810
    %827 = vst [vmem:[#allocation2 + $0x58] sm:$0xff] %v811
    %828 = vst [vmem:[#allocation2 + $0x60] sm:$0xff] %v812
    %829 = vst [vmem:[#allocation2 + $0x68] sm:$0xff] %v813
    %830 = vst [vmem:[#allocation2 + $0x70] sm:$0xff] %v814
    %831 = vst [vmem:[#allocation2 + $0x78] sm:$0xff] %v815
    // Predicated region
    $region30: #{tpu_custom_call.1} parent=1 // pred_check
      _
    $region31: #{tpu_custom_call.1} parent=1 // pred_check_branch
      %833 = sbr.rel (0) target = $region33
    $region32: #{tpu_custom_call.1} parent=1 // pred_region
      %835 = vsyncadd [#allocation3], 0
      %s836 = sshll.u32 [#allocation2], 4
      %s837 = int_to_ptr.vmem [resolvable:$true] %s836
      %s838 = sshll.u32 %s7, 4
      %s839 = int_to_ptr.hbm [resolvable:$true] %s838
      %844 = dma.vmem_to_hbm [thread:$0]  %s837, 2048, %s839, [#allocation3], 128, 128, 8
    $region33: #{tpu_custom_call.1} parent=1 // pred_fallthru
      _
    // Predicated region
    $region34: #{tpu_custom_call.1} parent=1 // pred_check
      _
    $region35: #{tpu_custom_call.1} parent=1 // pred_check_branch
      %846 = sbr.rel (0) target = $region37
    $region36: #{tpu_custom_call.1} parent=1 // pred_region
      %848 = dma.done [#allocation3], 2048
    $region37: #{tpu_custom_call.1} parent=1 // pred_fallthru
      _
    %849 = vsyncpa [#allocation3], 1

</llo_original>
